<compile_context>
chip_gen: v7x
topology: tpu7x:2x2x1
jax: 0.10.0
libtpu: 0.0.40
codegen_flags: <defaults>
</compile_context>

<pallas_src>
import functools

import jax
import jax.numpy as jnp
from jax.experimental import pallas as pl
from jax.experimental.pallas import tpu as pltpu

_LANES = 128
_SUBLANES = 8


def _round_up(a, b):
    return (a + b - 1) // b * b


def _focal_tile_math(x, y, alpha, valid, *, class_axis, gamma):
    """Shared per-tile focal-loss math.

    x:     f32 logits with the class dim on `class_axis`.
    y:     i32 labels, size-1 on class_axis, broadcastable to x.
    alpha: f32 per-class weights, broadcastable to x along class_axis.
    valid: bool mask with the same shape as y.
    Returns (loss, valid_f), both with the class axis reduced to size 1.
    """
    # Numerically-stable log-softmax over the class axis.
    mx = jnp.max(x, axis=class_axis, keepdims=True)
    z = x - mx
    lse = jnp.log(jnp.sum(jnp.exp(z), axis=class_axis, keepdims=True))
    log_p = z - lse

    # One-hot selection as a single select (no bool->f32 cast + multiply); alpha is folded
    # through the same select.  NOTE: out-of-range labels (!= ignore_index) select nothing
    # -> loss 0 but still counted in the 'mean' denominator (torch would raise).
    cls = jax.lax.broadcasted_iota(jnp.int32, x.shape, dimension=class_axis)
    is_y = cls == y
    log_pt = jnp.sum(jnp.where(is_y, log_p, 0.0), axis=class_axis, keepdims=True)
    a_y = jnp.sum(jnp.where(is_y, alpha, 0.0), axis=class_axis, keepdims=True)
    ce = -(a_y * log_pt)

    pt = jnp.exp(log_pt)
    one_minus_pt = 1.0 - pt
    g = float(gamma)
    if g == 0.0:
        loss = ce                                   # (1 - pt)**0 == 1
    elif g == int(g) and 1.0 <= g <= 4.0:
        focal = one_minus_pt                        # small integer gamma -> VPU multiplies
        for _ in range(int(g) - 1):
            focal = focal * one_minus_pt
        loss = focal * ce
    else:
        # Clamp guards pt > 1 by 1 ulp producing NaN for fractional gamma.
        loss = (jnp.maximum(one_minus_pt, 0.0) ** g) * ce

    loss = jnp.where(valid, loss, 0.0)              # also kills tail-lane garbage (NaN-safe)
    valid_f = jnp.where(valid, 1.0, 0.0)
    return loss, valid_f


def _focal_nchw_kernel(x_ref, y_ref, alpha_ref, psum_ref, pcnt_ref,
                       *, gamma, ignore_index, m_total, tile_m, mask_tail):
    """One (batch, pixel-tile) grid step of the N-D (NCHW-style) path.

    x_ref:     (1, C, TM)   logits (f32/bf16), classes on sublanes, pixels on lanes
    y_ref:     (1, 1, TM)   i32 labels
    alpha_ref: (C, 1)       f32 per-class weights
    psum_ref:  (1, 1, 1, 1) f32 per-block loss sum
    pcnt_ref:  (1, 1, 1, 1) f32 per-block valid count
    """
    x = x_ref[0].astype(jnp.float32)     # (C, TM)
    y = y_ref[0]                          # (1, TM)

    valid = y != ignore_index
    if mask_tail:
        # Partial tail tile: lanes >= m_total hold unspecified data; masking `valid` is
        # enough (the per-lane garbage never crosses lanes, the final select zeroes it).
        col = pl.program_id(1) * tile_m + jax.lax.broadcasted_iota(jnp.int32, y.shape, 1)
        valid = jnp.logical_and(valid, col < m_total)

    loss, valid_f = _focal_tile_math(x, y, alpha_ref[...], valid,
                                     class_axis=0, gamma=gamma)

    # Per-block partial results (lane reduce rides the otherwise-idle XLU slot).
    psum_ref[...] = jnp.reshape(jnp.sum(loss, axis=1, keepdims=True), (1, 1, 1, 1))
    pcnt_ref[...] = jnp.reshape(jnp.sum(valid_f, axis=1, keepdims=True), (1, 1, 1, 1))


def _focal_nc_kernel(x_ref, y_ref, alpha_ref, psum_ref, pcnt_ref,
                     *, gamma, ignore_index, n_total, tile_n, mask_tail):
    """One row-tile grid step of the 2D (N, C) classification path.

    x_ref:     (TN, C)   logits (f32/bf16), rows on sublanes, classes on lanes
    y_ref:     (TN, 1)   i32 labels
    alpha_ref: (1, C)    f32 per-class weights
    psum_ref:  (1, 1, 1) f32 per-block loss sum
    pcnt_ref:  (1, 1, 1) f32 per-block valid count
    """
    x = x_ref[...].astype(jnp.float32)   # (TN, C)
    y = y_ref[...]                        # (TN, 1)

    valid = y != ignore_index
    if mask_tail:
        row = pl.program_id(0) * tile_n + jax.lax.broadcasted_iota(jnp.int32, y.shape, 0)
        valid = jnp.logical_and(valid, row < n_total)

    loss, valid_f = _focal_tile_math(x, y, alpha_ref[...], valid,
                                     class_axis=1, gamma=gamma)

    psum_ref[...] = jnp.reshape(jnp.sum(loss, axis=0, keepdims=True), (1, 1, 1))
    pcnt_ref[...] = jnp.reshape(jnp.sum(valid_f, axis=0, keepdims=True), (1, 1, 1))


def focal_loss(x, y, alpha=None, gamma=0.0, reduction="mean", ignore_index=-1,
               tile_m=65536, tile_n=4096):
    """Pallas implementation of FocalLoss.forward.

    x: (B, C) or (B, C, d1, ..., dK) raw logits (f32 or bf16).
    y: (B,)   or (B, d1, ..., dK)    integer class labels.
    """
    if reduction not in ("mean", "sum", "none"):
        raise ValueError('Reduction must be one of: "mean", "sum", "none".')
    if reduction == "none":
        # TODO(synk): reduction='none' returns a dynamically-sized (num-valid,) vector in
        # torch; not expressible as a static-shape Pallas output, so it is not supported.
        raise NotImplementedError("reduction='none' not supported in the Pallas kernel")

    if x.dtype not in (jnp.float32, jnp.bfloat16):
        x = x.astype(jnp.float32)
    if y.dtype != jnp.int32:
        # TODO(synk): accept int8/int16 labels natively (C < 128) to cut label HBM bytes.
        y = y.astype(jnp.int32)

    x_itemsize = 2 if x.dtype == jnp.bfloat16 else 4
    budget = 16 << 20  # target padded VMEM footprint of the double-buffered input blocks

    if x.ndim > 2:
        # ------- N-D path: free (B, C, M) view; classes on sublanes, pixels on lanes ----
        bsz, c = int(x.shape[0]), int(x.shape[1])
        m = 1
        for d in x.shape[2:]:
            m *= int(d)
        x_view = x.reshape(bsz, c, m)
        y_view = y.reshape(bsz, 1, m)

        # Padded, double-buffered VMEM bytes per pixel lane:
        #   logits: C rounded up to the sublane pack (8 f32 / 16 bf16) * itemsize,
        #   labels: 1 -> 8 sublanes of i32.
        sub_pack = 16 if x.dtype == jnp.bfloat16 else _SUBLANES
        per_lane = 2 * (_round_up(c, sub_pack) * x_itemsize + _SUBLANES * 4)
        max_tile = max(_LANES, (budget // per_lane) // _LANES * _LANES)
        tile = max(_LANES, (min(int(tile_m), max_tile) // _LANES) * _LANES)
        if m <= tile:
            tile, jm, mask_tail = m, 1, False        # full-extent last dim -> always legal
        else:
            jm = pl.cdiv(m, tile)
            mask_tail = (m % tile) != 0
        footprint = per_lane * tile
        vmem_limit = int(min(max(footprint + (16 << 20), 32 << 20), 48 << 20))

        alpha_arr = (jnp.ones((c, 1), jnp.float32) if alpha is None
                     else jnp.asarray(alpha, jnp.float32).reshape(c, 1))

        kernel = functools.partial(
            _focal_nchw_kernel, gamma=gamma, ignore_index=ignore_index,
            m_total=m, tile_m=tile, mask_tail=mask_tail)

        psum, pcnt = pl.pallas_call(
            kernel,
            out_shape=(jax.ShapeDtypeStruct((bsz, jm, 1, 1), jnp.float32),
                       jax.ShapeDtypeStruct((bsz, jm, 1, 1), jnp.float32)),
            grid_spec=pltpu.PrefetchScalarGridSpec(
                num_scalar_prefetch=0,
                grid=(bsz, jm),
                in_specs=[
                    pl.BlockSpec((1, c, tile), lambda b, j: (b, 0, j)),   # logits
                    pl.BlockSpec((1, 1, tile), lambda b, j: (b, 0, j)),   # labels
                    pl.BlockSpec((c, 1), lambda b, j: (0, 0)),            # alpha
                ],
                out_specs=[
                    pl.BlockSpec((1, 1, 1, 1), lambda b, j: (b, j, 0, 0)),
                    pl.BlockSpec((1, 1, 1, 1), lambda b, j: (b, j, 0, 0)),
                ],
            ),
            compiler_params=pltpu.CompilerParams(
                dimension_semantics=("parallel", "parallel"),
                vmem_limit_bytes=vmem_limit),
        )(x_view, y_view, alpha_arr)
    else:
        # ------- 2D path: row-major (TN, C) blocks, classes on lanes (no transpose) -----
        n, c = int(x.shape[0]), int(x.shape[1])
        y_view = y.reshape(n, 1)

        per_row = 2 * (_round_up(c, _LANES) * x_itemsize + _LANES * 4)
        max_rows = max(_SUBLANES, (budget // per_row) // _SUBLANES * _SUBLANES)
        tn = max(_SUBLANES, (min(int(tile_n), max_rows) // _SUBLANES) * _SUBLANES)
        if n <= tn:
            tn, jn, mask_tail = n, 1, False
        else:
            jn = pl.cdiv(n, tn)
            mask_tail = (n % tn) != 0
        footprint = per_row * tn
        vmem_limit = int(min(max(footprint + (16 << 20), 32 << 20), 48 << 20))

        alpha_arr = (jnp.ones((1, c), jnp.float32) if alpha is None
                     else jnp.asarray(alpha, jnp.float32).reshape(1, c))

        kernel = functools.partial(
            _focal_nc_kernel, gamma=gamma, ignore_index=ignore_index,
            n_total=n, tile_n=tn, mask_tail=mask_tail)

        psum, pcnt = pl.pallas_call(
            kernel,
            out_shape=(jax.ShapeDtypeStruct((jn, 1, 1), jnp.float32),
                       jax.ShapeDtypeStruct((jn, 1, 1), jnp.float32)),
            grid_spec=pltpu.PrefetchScalarGridSpec(
                num_scalar_prefetch=0,
                grid=(jn,),
                in_specs=[
                    pl.BlockSpec((tn, c), lambda i: (i, 0)),   # logits
                    pl.BlockSpec((tn, 1), lambda i: (i, 0)),   # labels
                    pl.BlockSpec((1, c), lambda i: (0, 0)),    # alpha
                ],
                out_specs=[
                    pl.BlockSpec((1, 1, 1), lambda i: (i, 0, 0)),
                    pl.BlockSpec((1, 1, 1), lambda i: (i, 0, 0)),
                ],
            ),
            compiler_params=pltpu.CompilerParams(
                dimension_semantics=("parallel",),
                vmem_limit_bytes=vmem_limit),
        )(x, y_view, alpha_arr)

    # Tiny final reduction over the per-block partials (B*JM elements).
    total = jnp.sum(psum)
    count = jnp.sum(pcnt)

    if reduction == "mean":
        # torch returns tensor(0.0) when no un-ignored labels exist.
        return jnp.where(count > 0, total / jnp.maximum(count, 1.0), 0.0)
    return jnp.where(count > 0, total, 0.0)


def _focal_loss_ref(x, y, alpha, gamma, ignore_index, reduction="mean"):
    """Pure-JAX reference mirroring the PyTorch forward."""
    x = x.astype(jnp.float32)
    y = y.astype(jnp.int32)
    if x.ndim > 2:
        c = x.shape[1]
        perm = (0,) + tuple(range(2, x.ndim)) + (1,)
        x = jnp.transpose(x, perm).reshape(-1, c)
        y = y.reshape(-1)
    c = x.shape[1]
    if alpha is None:
        alpha = jnp.ones((c,), dtype=jnp.float32)
    alpha = jnp.asarray(alpha, dtype=jnp.float32)
    mask = y != ignore_index
    log_p = jax.nn.log_softmax(x, axis=-1)
    y_safe = jnp.where(mask, y, 0)
    log_pt = jnp.take_along_axis(log_p, y_safe[:, None], axis=-1)[:, 0]
    ce = -alpha[y_safe] * log_pt
    pt = jnp.exp(log_pt)
    if gamma == 0.0:
        focal = jnp.ones_like(pt)
    else:
        focal = jnp.maximum(1.0 - pt, 0.0) ** gamma
    loss = focal * ce * mask.astype(jnp.float32)
    cnt = jnp.sum(mask.astype(jnp.float32))
    if reduction == "mean":
        return jnp.where(cnt > 0, jnp.sum(loss) / jnp.maximum(cnt, 1.0), 0.0)
    return jnp.sum(loss)


if __name__ == "__main__":
    key = jax.random.PRNGKey(0)
    k_x, k_y, k_ign, k_x2, k_y2, k_x3, k_y3 = jax.random.split(key, 7)

    ignore_index = -1
    alpha = jnp.array([0.1, 0.2, 0.3, 0.4], dtype=jnp.float32)

    # --- Test 1: 4D NCHW, f32, gamma=2 (integer fast path), mean reduction -------------
    B, C, H, W = 2, 4, 16, 16
    x = jax.random.normal(k_x, (B, C, H, W), dtype=jnp.float32)
    y = jax.random.randint(k_y, (B, H, W), 0, C, dtype=jnp.int32)
    ign = jax.random.uniform(k_ign, (B, H, W)) < 0.15
    y = jnp.where(ign, ignore_index, y)

    out1 = jax.block_until_ready(
        focal_loss(x, y, alpha=alpha, gamma=2.0, reduction="mean",
                   ignore_index=ignore_index))
    ref1 = _focal_loss_ref(x, y, alpha, 2.0, ignore_index, "mean")
    assert jnp.allclose(out1, ref1, rtol=1e-5, atol=1e-6), (out1, ref1)

    # --- Test 2: non-128-divisible spatial size (masked tail tile), fractional gamma ----
    H2, W2 = 15, 15
    x2 = jax.random.normal(k_x2, (B, C, H2, W2), dtype=jnp.float32)
    y2 = jax.random.randint(k_y2, (B, H2, W2), 0, C, dtype=jnp.int32)
    y2 = y2.at[0, 0, 0].set(ignore_index)
    out2 = jax.block_until_ready(
        focal_loss(x2, y2, alpha=alpha, gamma=2.5, reduction="mean",
                   ignore_index=ignore_index, tile_m=128))   # forces multi-block + tail
    ref2 = _focal_loss_ref(x2, y2, alpha, 2.5, ignore_index, "mean")
    assert jnp.allclose(out2, ref2, rtol=1e-5, atol=1e-6), (out2, ref2)

    # --- Test 3: 2D (N, C) path (no wrapper transpose), ragged row tail, sum reduction --
    N3 = 13
    x3 = jax.random.normal(k_x3, (N3, C), dtype=jnp.float32)
    y3 = jax.random.randint(k_y3, (N3,), 0, C, dtype=jnp.int32)
    y3 = y3.at[0].set(ignore_index)
    out3 = jax.block_until_ready(
        focal_loss(x3, y3, alpha=None, gamma=0.0, reduction="sum",
                   ignore_index=ignore_index, tile_n=8))     # forces a masked row tail
    ref3 = _focal_loss_ref(x3, y3, None, 0.0, ignore_index, "sum")
    assert jnp.allclose(out3, ref3, rtol=1e-5, atol=1e-6), (out3, ref3)

    # --- Test 4: bf16 logits (loaded as bf16, upcast in-kernel) -------------------------
    x_bf = x.astype(jnp.bfloat16)
    out4 = jax.block_until_ready(
        focal_loss(x_bf, y, alpha=alpha, gamma=2.0, reduction="mean",
                   ignore_index=ignore_index))
    ref4 = _focal_loss_ref(x_bf, y, alpha, 2.0, ignore_index, "mean")
    assert jnp.allclose(out4, ref4, rtol=1e-4, atol=1e-5), (out4, ref4)

    print("KERNEL_OK")
</pallas_src>

<mosaic_0001>
module attributes {stable_mosaic.version = 11 : i64} {
  func.func @_focal_nchw_kernel(%arg0: i32, %arg1: i32, %arg2: memref<1x4x256xf32, #tpu.memory_space<vmem>>, %arg3: memref<1x1x256xi32, #tpu.memory_space<vmem>>, %arg4: memref<4x1xf32, #tpu.memory_space<vmem>>, %arg5: memref<1x1x1x1xf32, #tpu.memory_space<vmem>>, %arg6: memref<1x1x1x1xf32, #tpu.memory_space<vmem>>) attributes {dimension_semantics = [#tpu.dimension_semantics<parallel>, #tpu.dimension_semantics<parallel>], iteration_bounds = array<i64: 2, 1>, scalar_prefetch = 0 : i64, scratch_operands = 0 : i64, tpu.core_type = #tpu.core_type<tc>, window_params = [{transform_indices = @transform_0, window_bounds = array<i64: 1, 4, 256>}, {transform_indices = @transform_1, window_bounds = array<i64: 1, 1, 256>}, {pipeline_mode = #tpu.pipeline_mode<synchronous>, transform_indices = @transform_2, window_bounds = array<i64: 4, 1>}, {transform_indices = @transform_3, window_bounds = array<i64: 1, 1, 1, 1>}, {transform_indices = @transform_4, window_bounds = array<i64: 1, 1, 1, 1>}]} {
    %c0 = arith.constant 0 : index
    %c0_0 = arith.constant 0 : index
    %c0_1 = arith.constant 0 : index
    %0 = vector.load %arg2[%c0, %c0_0, %c0_1] : memref<1x4x256xf32, #tpu.memory_space<vmem>>, vector<1x4x256xf32>
    %1 = vector.shape_cast %0 : vector<1x4x256xf32> to vector<4x256xf32>
    %c0_2 = arith.constant 0 : index
    %c0_3 = arith.constant 0 : index
    %c0_4 = arith.constant 0 : index
    %2 = vector.load %arg3[%c0_2, %c0_3, %c0_4] : memref<1x1x256xi32, #tpu.memory_space<vmem>>, vector<1x1x256xi32>
    %3 = vector.shape_cast %2 : vector<1x1x256xi32> to vector<1x256xi32>
    %c-1_i32 = arith.constant -1 : i32
    %4 = vector.broadcast %c-1_i32 : i32 to vector<1x256xi32>
    %5 = arith.cmpi ne, %3, %4 : vector<1x256xi32>
    %c0_5 = arith.constant 0 : index
    %c0_6 = arith.constant 0 : index
    %6 = vector.load %arg4[%c0_5, %c0_6] : memref<4x1xf32, #tpu.memory_space<vmem>>, vector<4x1xf32>
    %cst = arith.constant dense<0xFF800000> : vector<256xf32>
    %7 = vector.multi_reduction <maximumf>, %1, %cst [0] : vector<4x256xf32> to vector<256xf32>
    %8 = vector.shape_cast %7 : vector<256xf32> to vector<1x256xf32>
    %9 = vector.broadcast %8 : vector<1x256xf32> to vector<4x256xf32>
    %10 = arith.subf %1, %9 : vector<4x256xf32>
    %11 = math.exp %10 : vector<4x256xf32>
    %cst_7 = arith.constant dense<0.000000e+00> : vector<256xf32>
    %12 = vector.multi_reduction <add>, %11, %cst_7 [0] : vector<4x256xf32> to vector<256xf32>
    %13 = vector.shape_cast %12 : vector<256xf32> to vector<1x256xf32>
    %14 = math.log %13 : vector<1x256xf32>
    %15 = vector.broadcast %14 : vector<1x256xf32> to vector<4x256xf32>
    %16 = arith.subf %10, %15 : vector<4x256xf32>
    %17 = tpu.iota {dimensions = array<i32: 0>} : vector<4x256xi32>
    %18 = vector.broadcast %3 : vector<1x256xi32> to vector<4x256xi32>
    %19 = arith.cmpi eq, %17, %18 : vector<4x256xi32>
    %cst_8 = arith.constant 0.000000e+00 : f32
    %20 = vector.broadcast %cst_8 : f32 to vector<4x256xf32>
    %21 = arith.select %19, %16, %20 : vector<4x256xi1>, vector<4x256xf32>
    %cst_9 = arith.constant dense<0.000000e+00> : vector<256xf32>
    %22 = vector.multi_reduction <add>, %21, %cst_9 [0] : vector<4x256xf32> to vector<256xf32>
    %23 = vector.shape_cast %22 : vector<256xf32> to vector<1x256xf32>
    %cst_10 = arith.constant 0.000000e+00 : f32
    %24 = vector.shape_cast %6 : vector<4x1xf32> to vector<4x1xf32>
    %25 = vector.broadcast %24 : vector<4x1xf32> to vector<4x256xf32>
    %26 = vector.broadcast %cst_10 : f32 to vector<4x256xf32>
    %27 = arith.select %19, %25, %26 : vector<4x256xi1>, vector<4x256xf32>
    %cst_11 = arith.constant dense<0.000000e+00> : vector<256xf32>
    %28 = vector.multi_reduction <add>, %27, %cst_11 [0] : vector<4x256xf32> to vector<256xf32>
    %29 = vector.shape_cast %28 : vector<256xf32> to vector<1x256xf32>
    %30 = arith.mulf %29, %23 : vector<1x256xf32>
    %cst_12 = arith.constant 0.000000e+00 : f32
    %31 = vector.broadcast %cst_12 : f32 to vector<1x256xf32>
    %32 = arith.subf %31, %30 : vector<1x256xf32>
    %33 = math.exp %23 : vector<1x256xf32>
    %cst_13 = arith.constant 1.000000e+00 : f32
    %34 = vector.broadcast %cst_13 : f32 to vector<1x256xf32>
    %35 = arith.subf %34, %33 : vector<1x256xf32>
    %36 = arith.mulf %35, %35 : vector<1x256xf32>
    %37 = arith.mulf %36, %32 : vector<1x256xf32>
    %cst_14 = arith.constant 0.000000e+00 : f32
    %38 = vector.broadcast %cst_14 : f32 to vector<1x256xf32>
    %39 = arith.select %5, %37, %38 : vector<1x256xi1>, vector<1x256xf32>
    %cst_15 = arith.constant 1.000000e+00 : f32
    %cst_16 = arith.constant 0.000000e+00 : f32
    %40 = vector.broadcast %cst_15 : f32 to vector<1x256xf32>
    %41 = vector.broadcast %cst_16 : f32 to vector<1x256xf32>
    %42 = arith.select %5, %40, %41 : vector<1x256xi1>, vector<1x256xf32>
    %cst_17 = arith.constant dense<0.000000e+00> : vector<1xf32>
    %43 = vector.multi_reduction <add>, %39, %cst_17 [1] : vector<1x256xf32> to vector<1xf32>
    %44 = vector.shape_cast %43 : vector<1xf32> to vector<1x1xf32>
    %45 = vector.shape_cast %44 : vector<1x1xf32> to vector<1x1x1x1xf32>
    %c0_18 = arith.constant 0 : index
    %c0_19 = arith.constant 0 : index
    %c0_20 = arith.constant 0 : index
    %c0_21 = arith.constant 0 : index
    %46 = vector.load %arg5[%c0_18, %c0_19, %c0_20, %c0_21] : memref<1x1x1x1xf32, #tpu.memory_space<vmem>>, vector<1x1x1x1xf32>
    tpu.vector_store %arg5[%c0_18, %c0_19, %c0_20, %c0_21], %45 {strides = array<i32>} : memref<1x1x1x1xf32, #tpu.memory_space<vmem>>, vector<1x1x1x1xf32>,
    %cst_22 = arith.constant dense<0.000000e+00> : vector<1xf32>
    %47 = vector.multi_reduction <add>, %42, %cst_22 [1] : vector<1x256xf32> to vector<1xf32>
    %48 = vector.shape_cast %47 : vector<1xf32> to vector<1x1xf32>
    %49 = vector.shape_cast %48 : vector<1x1xf32> to vector<1x1x1x1xf32>
    %c0_23 = arith.constant 0 : index
    %c0_24 = arith.constant 0 : index
    %c0_25 = arith.constant 0 : index
    %c0_26 = arith.constant 0 : index
    %50 = vector.load %arg6[%c0_23, %c0_24, %c0_25, %c0_26] : memref<1x1x1x1xf32, #tpu.memory_space<vmem>>, vector<1x1x1x1xf32>
    tpu.vector_store %arg6[%c0_23, %c0_24, %c0_25, %c0_26], %49 {strides = array<i32>} : memref<1x1x1x1xf32, #tpu.memory_space<vmem>>, vector<1x1x1x1xf32>,
    return
  }
  func.func @transform_0(%arg0: i32, %arg1: i32) -> (i32, i32, i32) {
    %c0_i32 = arith.constant 0 : i32
    %c0_i32_0 = arith.constant 0 : i32
    return %arg0, %c0_i32, %arg1 : i32, i32, i32
  }
  func.func @transform_1(%arg0: i32, %arg1: i32) -> (i32, i32, i32) {
    %c0_i32 = arith.constant 0 : i32
    %c0_i32_0 = arith.constant 0 : i32
    return %arg0, %c0_i32, %arg1 : i32, i32, i32
  }
  func.func @transform_2(%arg0: i32, %arg1: i32) -> (i32, i32) {
    %c0_i32 = arith.constant 0 : i32
    %c0_i32_0 = arith.constant 0 : i32
    %c0_i32_1 = arith.constant 0 : i32
    return %c0_i32, %c0_i32_0 : i32, i32
  }
  func.func @transform_3(%arg0: i32, %arg1: i32) -> (i32, i32, i32, i32) {
    %c0_i32 = arith.constant 0 : i32
    %c0_i32_0 = arith.constant 0 : i32
    %c0_i32_1 = arith.constant 0 : i32
    return %arg0, %arg1, %c0_i32, %c0_i32_0 : i32, i32, i32, i32
  }
  func.func @transform_4(%arg0: i32, %arg1: i32) -> (i32, i32, i32, i32) {
    %c0_i32 = arith.constant 0 : i32
    %c0_i32_0 = arith.constant 0 : i32
    %c0_i32_1 = arith.constant 0 : i32
    return %arg0, %arg1, %c0_i32, %c0_i32_0 : i32, i32, i32, i32
  }
}

</mosaic_0001>

<llo_original>
// kernel: tpu_custom_call.1
$region0: #{tpu_custom_call.1}
  #allocation0 [shape = 'u32[]', space=smem, size = 0x4, offset = 0x4, fixed_abs, tag = 'smem constant byte address 0x4 - core index']
  #allocation1 [shape = 'u32[144,128]{1,0:T(1,128)}', space=vmem, size = 0x12000, scoped, tag = 'internal scratch']
  %s0 = inlined_call_operand.hbm [shape: f32[2,4,256], index: 0, kind: input, shape index: {}]
  %s1 = inlined_call_operand.vmem [shape: s32[2,1,256], index: 1, kind: input, shape index: {}]
  %s2 = inlined_call_operand.vmem [shape: f32[4,1], index: 2, kind: input, shape index: {}]
  %s3 = inlined_call_operand.vmem [shape: f32[2,1,1,1], index: 3, kind: output, shape index: {0}]
  %s4 = inlined_call_operand.vmem [shape: f32[2,1,1,1], index: 4, kind: output, shape index: {1}]
  %5 = xla_tuple %s3, %s4
  %s6 = sld [smem:[#allocation0]]
  $region57: #{tpu_custom_call.1} parent=0
    _
  %s8 = ssub.s32 1, %s6
  %s9 = scalar_select 0, %s8, %s6
  $region1: #{tpu_custom_call.1} parent=0
    #allocation2 [shape = 'u8[8192]{0}', space=vmem, size = 0x2000, scoped, tag = 'input window, operand 0']
    #allocation3 [shape = 's32[2]{0}', space=sflag, size = 0x8, scoped, tag = 'scoped memory for tpu_custom_call.1']
    %10 = vsyncpa [#allocation3], 0
    %s11 = scalar_lea.sflag [#allocation3], 1
    %12 = vsyncpa %s11, 0
    loop: start=0, step=1, limit=4
    $region2: #{tpu_custom_call.1} parent=1 // loop_pre_header
      _
    $region3: #{tpu_custom_call.1} parent=1 // loop_header
      %s14 = sphi 0, %s18
      %p15 = scmp.ge.s32.totalorder %s14, 4
      %s21 = sphi 0, %s33
      %s22 = sphi 0, %s29
      %s23 = sphi 0, %s21
      %s24 = sphi 0, %s22
      %s25 = sphi 0, %s23
      %s26 = sphi 0, %s24
      %s38 = sphi 0, %s40
      %s41 = sphi 0, %s38
      %s42 = sphi 0, %s41
      %s58 = sphi 0, %s42
      %s66 = sphi 0, %s68
      %s69 = sphi 0, %s66
      %s70 = sphi 0, %s69
      %s86 = sphi 0, %s70
      %s90 = sphi 0, %s90
      %s92 = sphi 0, %s90
      %s93 = sphi 0, %s92
      %s107 = sphi 0, %s93
      %s115 = sphi 0, %s117
      %s118 = sphi 0, %s115
      %s119 = sphi 0, %s118
      %s135 = sphi 0, %s119
      %s143 = sphi 0, %s145
      %s146 = sphi 0, %s143
      %s147 = sphi 0, %s146
      %s163 = sphi 0, %s147
    $region4: #{tpu_custom_call.1} parent=1 // loop_header_branch
      %17 = sbr.rel (%p15) target = $region8
    $region5: #{tpu_custom_call.1} parent=1 // loop_body
      %s19 = ssub.s32 %s14, 1
      %s20 = ssub.s32 %s14, 2
      %s27 = sadd.s32 1, %s22
      %p28 = scmp.ge.s32.totalorder %s27, 1
      %s29 = scalar_select %p28, 0, %s27
      %s30 = sadd.s32 1, %s21
      %s31 = scalar_select %p28, %s30, %s21
      %p32 = scmp.ge.s32.totalorder %s31, 2
      %s33 = scalar_select %p32, 0, %s31
      %s34 = ssub.s32 %s21, %s33
      %s35 = ssub.s32 %s22, %s29
      %s36 = sor.u32 %s34, %s35
      %p37 = scmp.eq.s32.totalorder %s36, 0
      %s39 = sadd.s32 %s38, 1
      %s40 = scalar_select %p37, %s38, %s39
      %p43 = pneg %p37
      %p44 = scmp.eq.s32.totalorder %s14, 1
      %p45 = por %p43, %p44
      %p46 = scmp.ne.s32.totalorder %s38, %s41
      %p47 = scmp.eq.s32.totalorder %s14, 0
      %p48 = por %p46, %p47
      %p49 = scmp.ne.s32.totalorder %s38, %s41
      %p50 = scmp.eq.s32.totalorder %s19, 1
      %p51 = por %p49, %p50
      %p52 = scmp.ne.s32.totalorder %s41, %s42
      %p53 = scmp.eq.s32.totalorder %s19, 0
      %p54 = por %p52, %p53
      %p55 = scmp.ne.s32.totalorder %s41, %s42
      %p56 = scmp.eq.s32.totalorder %s20, 1
      %p57 = por %p55, %p56
      %p59 = scmp.ne.s32.totalorder %s42, %s58
      %p60 = scmp.eq.s32.totalorder %s20, 0
      %p61 = por %p59, %p60
      %s62 = ssub.s32 %s21, %s33
      %s63 = ssub.s32 %s22, %s29
      %s64 = sor.u32 %s62, %s63
      %p65 = scmp.eq.s32.totalorder %s64, 0
      %s67 = sadd.s32 %s66, 1
      %s68 = scalar_select %p65, %s66, %s67
      %p71 = pneg %p65
      %p72 = scmp.eq.s32.totalorder %s14, 1
      %p73 = por %p71, %p72
      %p74 = scmp.ne.s32.totalorder %s66, %s69
      %p75 = scmp.eq.s32.totalorder %s14, 0
      %p76 = por %p74, %p75
      %p77 = scmp.ne.s32.totalorder %s66, %s69
      %p78 = scmp.eq.s32.totalorder %s19, 1
      %p79 = por %p77, %p78
      %p80 = scmp.ne.s32.totalorder %s69, %s70
      %p81 = scmp.eq.s32.totalorder %s19, 0
      %p82 = por %p80, %p81
      %p83 = scmp.ne.s32.totalorder %s69, %s70
      %p84 = scmp.eq.s32.totalorder %s20, 1
      %p85 = por %p83, %p84
      %p87 = scmp.ne.s32.totalorder %s70, %s86
      %p88 = scmp.eq.s32.totalorder %s20, 0
      %p89 = por %p87, %p88
      %s91 = sadd.s32 %s90, 1
      %p94 = scmp.eq.s32.totalorder %s14, 1
      %p95 = scmp.ne.s32.totalorder %s90, %s92
      %p96 = scmp.eq.s32.totalorder %s14, 0
      %p97 = por %p95, %p96
      %p98 = scmp.ne.s32.totalorder %s90, %s92
      %p99 = scmp.eq.s32.totalorder %s19, 1
      %p100 = por %p98, %p99
      %p101 = scmp.ne.s32.totalorder %s92, %s93
      %p102 = scmp.eq.s32.totalorder %s19, 0
      %p103 = por %p101, %p102
      %p104 = scmp.ne.s32.totalorder %s92, %s93
      %p105 = scmp.eq.s32.totalorder %s20, 1
      %p106 = por %p104, %p105
      %p108 = scmp.ne.s32.totalorder %s93, %s107
      %p109 = scmp.eq.s32.totalorder %s20, 0
      %p110 = por %p108, %p109
      %s111 = ssub.s32 %s21, %s33
      %s112 = ssub.s32 %s22, %s29
      %s113 = sor.u32 %s111, %s112
      %p114 = scmp.eq.s32.totalorder %s113, 0
      %s116 = sadd.s32 %s115, 1
      %s117 = scalar_select %p114, %s115, %s116
      %p120 = pneg %p114
      %p121 = scmp.eq.s32.totalorder %s14, 1
      %p122 = por %p120, %p121
      %p123 = scmp.ne.s32.totalorder %s115, %s118
      %p124 = scmp.eq.s32.totalorder %s14, 0
      %p125 = por %p123, %p124
      %p126 = scmp.ne.s32.totalorder %s115, %s118
      %p127 = scmp.eq.s32.totalorder %s19, 1
      %p128 = por %p126, %p127
      %p129 = scmp.ne.s32.totalorder %s118, %s119
      %p130 = scmp.eq.s32.totalorder %s19, 0
      %p131 = por %p129, %p130
      %p132 = scmp.ne.s32.totalorder %s118, %s119
      %p133 = scmp.eq.s32.totalorder %s20, 1
      %p134 = por %p132, %p133
      %p136 = scmp.ne.s32.totalorder %s119, %s135
      %p137 = scmp.eq.s32.totalorder %s20, 0
      %p138 = por %p136, %p137
      %s139 = ssub.s32 %s21, %s33
      %s140 = ssub.s32 %s22, %s29
      %s141 = sor.u32 %s139, %s140
      %p142 = scmp.eq.s32.totalorder %s141, 0
      %s144 = sadd.s32 %s143, 1
      %s145 = scalar_select %p142, %s143, %s144
      %p148 = pneg %p142
      %p149 = scmp.eq.s32.totalorder %s14, 1
      %p150 = por %p148, %p149
      %p151 = scmp.ne.s32.totalorder %s143, %s146
      %p152 = scmp.eq.s32.totalorder %s14, 0
      %p153 = por %p151, %p152
      %p154 = scmp.ne.s32.totalorder %s143, %s146
      %p155 = scmp.eq.s32.totalorder %s19, 1
      %p156 = por %p154, %p155
      %p157 = scmp.ne.s32.totalorder %s146, %s147
      %p158 = scmp.eq.s32.totalorder %s19, 0
      %p159 = por %p157, %p158
      %p160 = scmp.ne.s32.totalorder %s146, %s147
      %p161 = scmp.eq.s32.totalorder %s20, 1
      %p162 = por %p160, %p161
      %p164 = scmp.ne.s32.totalorder %s147, %s163
      %p165 = scmp.eq.s32.totalorder %s20, 0
      %p166 = por %p164, %p165
      %p167 = scmp.le.s32.totalorder 1, %s14
      %p168 = scmp.lt.s32.totalorder %s14, 3
      %p169 = pnand %p167, %p168
      %p170 = pneg %p169
      // Predicated region
      $region9: #{tpu_custom_call.1} parent=5 // pred_check
        _
      $region10: #{tpu_custom_call.1} parent=5 // pred_check_branch
        %172 = sbr.rel (%p169) target = $region12
      $region11: #{tpu_custom_call.1} parent=5 // pred_region
        %s173 = ssub.s32 %s14, 1
        // Predicated region
        $region13: #{tpu_custom_call.1} parent=11 // pred_check
          %p174 = pneg %p103
        $region14: #{tpu_custom_call.1} parent=11 // pred_check_branch
          %176 = sbr.rel (%p174) target = $region16
        $region15: #{tpu_custom_call.1} parent=11 // pred_region
          _
        $region16: #{tpu_custom_call.1} parent=11 // pred_fallthru
          _
      $region12: #{tpu_custom_call.1} parent=5 // pred_fallthru
        _
      %p177 = scmp.lt.s32.totalorder %s14, 2
      // Predicated region
      $region17: #{tpu_custom_call.1} parent=5 // pred_check
        %p178 = pneg %p177
      $region18: #{tpu_custom_call.1} parent=5 // pred_check_branch
        %180 = sbr.rel (%p178) target = $region20
      $region19: #{tpu_custom_call.1} parent=5 // pred_region
        // Predicated region
        $region21: #{tpu_custom_call.1} parent=19 // pred_check
          %p181 = pneg %p48
        $region22: #{tpu_custom_call.1} parent=19 // pred_check_branch
          %183 = sbr.rel (%p181) target = $region24
        $region23: #{tpu_custom_call.1} parent=19 // pred_region
          %s184 = sand.u32 %s38, 1
          %s185 = scalar_lea.sflag [#allocation3], %s184
          %s186 = sand.u32 %s38, 1
          %s187 = smul.addr %s186, 8
          %s188 = scalar_lea.vmem [#allocation2], %s187
          %s189 = smul.u32 2, %s22
          %s191 = ssub.s32 128, 128
          %192 = vsyncadd %s185, %s191
          %s193 = smul.addr %s21, 2
          %s194 = sadd.s32 %s189, %s193
          %s195 = smul.addr %s194, 64
          %s196 = scalar_lea.hbm %s0, %s195
          %s198 = sshll.u32 %s188, 4
          %s199 = int_to_ptr.vmem [resolvable:$true] %s198
          %201 = dma.hbm_to_vmem [thread:$0]  %s196, 128, %s199, %s185
        $region24: #{tpu_custom_call.1} parent=19 // pred_fallthru
          _
        // Predicated region
        $region25: #{tpu_custom_call.1} parent=19 // pred_check
          %p202 = pneg %p76
        $region26: #{tpu_custom_call.1} parent=19 // pred_check_branch
          %204 = sbr.rel (%p202) target = $region28
        $region27: #{tpu_custom_call.1} parent=19 // pred_region
          %s205 = smul.u32 2, %s22
          %p206 = scmp.lt.s32.totalorder %s21, 1
          %s207 = scalar_select %p206, %s21, 1
          %p208 = scmp.lt.s32.totalorder %s205, 1
          %s209 = scalar_select %p208, %s205, 1
          %s210 = smul.addr %s207, 2
          %s211 = sadd.s32 %s209, %s210
          %s212 = scalar_lea.vmem %s1, %s211
          %s213 = smul.u32 2, %s22
        $region28: #{tpu_custom_call.1} parent=19 // pred_fallthru
          _
      $region20: #{tpu_custom_call.1} parent=5 // pred_fallthru
        _
      %p214 = scmp.le.s32.totalorder 1, %s14
      %p215 = scmp.lt.s32.totalorder %s14, 3
      %p216 = pnand %p214, %p215
      %p217 = pneg %p216
      // Predicated region
      $region29: #{tpu_custom_call.1} parent=5 // pred_check
        _
      $region30: #{tpu_custom_call.1} parent=5 // pred_check_branch
        %219 = sbr.rel (%p216) target = $region32
      $region31: #{tpu_custom_call.1} parent=5 // pred_region
        %s220 = ssub.s32 %s14, 1
        %s221 = sand.u32 %s41, 1
        %s222 = scalar_lea.sflag [#allocation3], %s221
        %s223 = sand.u32 %s41, 1
        %s224 = smul.addr %s223, 8
        %s225 = scalar_lea.vmem [#allocation2], %s224
        // Predicated region
        $region33: #{tpu_custom_call.1} parent=31 // pred_check
          %p226 = pneg %p54
        $region34: #{tpu_custom_call.1} parent=31 // pred_check_branch
          %228 = sbr.rel (%p226) target = $region36
        $region35: #{tpu_custom_call.1} parent=31 // pred_region
          %229 = dma.done %s222, 128
        $region36: #{tpu_custom_call.1} parent=31 // pred_fallthru
          _
        %s230 = sand.u32 %s41, 1
        %s231 = scalar_lea.sflag [#allocation3], %s230
        %s232 = sand.u32 %s41, 1
        %s233 = smul.addr %s232, 8
        %s234 = scalar_lea.vmem [#allocation2], %s233
        %p235 = pneg %p54
        %p236 = pneg %p51
        %s237 = smul.u32 2, %s24
        %p238 = scmp.lt.s32.totalorder %s23, 1
        %s239 = scalar_select %p238, %s23, 1
        %p240 = scmp.lt.s32.totalorder %s237, 1
        %s241 = scalar_select %p240, %s237, 1
        %s242 = smul.addr %s239, 2
        %s243 = sadd.s32 %s241, %s242
        %s244 = scalar_lea.vmem %s1, %s243
        %p245 = pneg %p82
        %p246 = pneg %p79
        %p247 = pneg %p103
        %p248 = pneg %p100
        %p249 = pneg %p131
        %p250 = pneg %p128
        %p251 = scmp.lt.s32.totalorder %s23, 1
        %s252 = scalar_select %p251, %s23, 1
        %p253 = scmp.lt.s32.totalorder %s24, 0
        %s254 = scalar_select %p253, %s24, 0
        %s255 = sadd.s32 %s254, %s252
        %s256 = scalar_lea.vmem %s3, %s255
        %p257 = pneg %p159
        %p258 = pneg %p156
        %p259 = scmp.lt.s32.totalorder %s23, 1
        %s260 = scalar_select %p259, %s23, 1
        %p261 = scmp.lt.s32.totalorder %s24, 0
        %s262 = scalar_select %p261, %s24, 0
        %s263 = sadd.s32 %s262, %s260
        %s264 = scalar_lea.vmem %s4, %s263
        %s265 = smul.u32 2, %s24
        %s266 = smul.u32 2, %s24
        %p267 = scmp.lt.s32.totalorder %s23, 1
        %s268 = scalar_select %p267, %s23, 1
        %p269 = scmp.lt.s32.totalorder %s266, 1
        %s270 = scalar_select %p269, %s266, 1
        %s271 = smul.addr %s268, 2
        %s272 = sadd.s32 %s270, %s271
        %s273 = scalar_lea.vmem %s1, %s272
        %s274 = smul.u32 2, %s24
        %p275 = scmp.lt.s32.totalorder %s23, 1
        %s276 = scalar_select %p275, %s23, 1
        %p277 = scmp.lt.s32.totalorder %s24, 0
        %s278 = scalar_select %p277, %s24, 0
        %s279 = sadd.s32 %s278, %s276
        %s280 = scalar_lea.vmem %s3, %s279
        %p281 = scmp.lt.s32.totalorder %s23, 1
        %s282 = scalar_select %p281, %s23, 1
        %p283 = scmp.lt.s32.totalorder %s24, 0
        %s284 = scalar_select %p283, %s24, 0
        %s285 = sadd.s32 %s284, %s282
        %s286 = scalar_lea.vmem %s4, %s285
        %v287 = vld [vmem:[%s225] sm:$0xff]
        %v288 = vld [vmem:[%s273] sm:$0x3]
        %vm289 = vcmp.ne.s32.totalorder %v288, 4294967295
        %v290 = vld [vmem:[%s2] sm:$0xf]
        %v292 = vcombine.high %v287, %v287
        %vm294 = vcmask 1043456
        %v295 = vsel %vm294, %v287, -inf
        %v296 = vrot.slane %v295, 4
        %v297 = vmax.f32 %v295, %v296
        %v298 = vrot.slane %v297, 2
        %v299 = vmax.f32 %v297, %v298
        %v300 = vrot.slane %v299, 1
        %v301 = vmax.f32 %v299, %v300
        %v302 = vsel %vm294, %v292, -inf
        %v303 = vrot.slane %v302, 4
        %v304 = vmax.f32 %v302, %v303
        %v305 = vrot.slane %v304, 2
        %v306 = vmax.f32 %v304, %v305
        %v307 = vrot.slane %v306, 1
        %v308 = vmax.f32 %v306, %v307
        %v311 = vcombine.low %v301, %v308
        %v313 = vsub.f32 %v287, %v311
        %v314 = vmul.f32 %v313, 1.442695
        %v315 = vpow.pop %v314
        %v317 = vcombine.high %v315, %v315
        %v319 = vsel %vm294, %v315, 0.0
        %v320 = vrot.slane %v319, 4
        %v321 = vadd.f32 %v319, %v320
        %v322 = vrot.slane %v321, 2
        %v323 = vadd.f32 %v321, %v322
        %v324 = vrot.slane %v323, 1
        %v325 = vadd.f32 %v323, %v324
        %v326 = vsel %vm294, %v317, 0.0
        %v327 = vrot.slane %v326, 4
        %v328 = vadd.f32 %v326, %v327
        %v329 = vrot.slane %v328, 2
        %v330 = vadd.f32 %v328, %v329
        %v331 = vrot.slane %v330, 1
        %v332 = vadd.f32 %v330, %v331
        %v333 = vlog2.pop %v325
        %v334 = vmul.f32 %v333, 0.6931472
        %v335 = vlog2.pop %v332
        %v336 = vmul.f32 %v335, 0.6931472
        %v339 = vcombine.low %v334, %v336
        %v341 = vsub.f32 %v313, %v339
        %v342 = vlaneseq
        %v343 = vshrl.u32 %v342, 7
        %v344 = vlaneseq
        %v345 = vshrl.u32 %v344, 7
        %v346 = vsub.s32 0, %v345
        %v347 = vrot.slane %v288, %v346
        %v348 = vlaneseq
        %v349 = vshrl.u32 %v348, 7
        %v350 = vsub.s32 1, %v349
        %v351 = vrot.slane %v288, %v350
        %vm352 = vcmp.eq.s32.totalorder %v343, %v347
        %vm353 = vcmp.eq.s32.totalorder %v343, %v351
        %v355 = vcombine.high %v341, %v341
        %v357 = vsel %vm352, %v341, 0.0
        %v358 = vsel %vm353, %v355, 0.0
        %v359 = vsel %vm294, %v357, 0.0
        %v360 = vrot.slane %v359, 4
        %v361 = vadd.f32 %v359, %v360
        %v362 = vrot.slane %v361, 2
        %v363 = vadd.f32 %v361, %v362
        %v364 = vrot.slane %v363, 1
        %v365 = vadd.f32 %v363, %v364
        %v366 = vsel %vm294, %v358, 0.0
        %v367 = vrot.slane %v366, 4
        %v368 = vadd.f32 %v366, %v367
        %v369 = vrot.slane %v368, 2
        %v370 = vadd.f32 %v368, %v369
        %v371 = vrot.slane %v370, 1
        %v372 = vadd.f32 %v370, %v371
        %374 = vset.pattern.permute.xlu0 0
        %375 = vperm.xlu0 %374, %v290
        %v376 = vpop.permute.xlu0 %375
        %v378 = vsel %vm352, %v376, 0.0
        %v379 = vsel %vm353, %v376, 0.0
        %v380 = vsel %vm294, %v378, 0.0
        %v381 = vrot.slane %v380, 4
        %v382 = vadd.f32 %v380, %v381
        %v383 = vrot.slane %v382, 2
        %v384 = vadd.f32 %v382, %v383
        %v385 = vrot.slane %v384, 1
        %v386 = vadd.f32 %v384, %v385
        %v387 = vsel %vm294, %v379, 0.0
        %v388 = vrot.slane %v387, 4
        %v389 = vadd.f32 %v387, %v388
        %v390 = vrot.slane %v389, 2
        %v391 = vadd.f32 %v389, %v390
        %v392 = vrot.slane %v391, 1
        %v393 = vadd.f32 %v391, %v392
        %v394 = vmul.f32 %v386, %v365
        %v395 = vmul.f32 %v393, %v372
        %v396 = vsub.f32 0.0, %v394
        %v397 = vsub.f32 0.0, %v395
        %v398 = vmul.f32 %v365, 1.442695
        %v399 = vpow.pop %v398
        %v400 = vmul.f32 %v372, 1.442695
        %v401 = vpow.pop %v400
        %v402 = vsub.f32 1.0, %v399
        %v403 = vsub.f32 1.0, %v401
        %v404 = vmul.f32 %v402, %v402
        %v405 = vmul.f32 %v403, %v403
        %v406 = vmul.f32 %v404, %v396
        %v407 = vmul.f32 %v405, %v397
        %v410 = vcombine.low %v406, %v407
        %v412 = vunpack.c.l.s4 1966171168
        %v413 = vunpack.c.0.s8 %v412
        %v414 = vlaneseq
        %v415 = vshrl.u32 %v414, 7
        %v416 = vsub.s32 %v413, %v415
        %v417 = vrot.slane %v410, %v416
        %v419 = vunpack.c.l.s4 1966171168
        %v420 = vunpack.c.0.s8 %v419
        %v421 = vlaneseq
        %v422 = vshrl.u32 %v421, 7
        %v423 = vsub.s32 %v420, %v422
        %v424 = vrot.slane %v417, %v423
        %v426 = vsel %vm289, %v424, 0.0
        %v427 = vsel %vm289, 1.0, 0.0
        %v429 = vlaneseq
        %v430 = vshrl.u32 %v429, 7
        %v431 = vsub.s32 0, %v430
        %v432 = vrot.slane %v426, %v431
        %v433 = vlaneseq
        %v434 = vshrl.u32 %v433, 7
        %v435 = vsub.s32 1, %v434
        %v436 = vrot.slane %v426, %v435
        %vm439 = vcmask 1040384
        %v440 = vsel %vm439, %v432, 0.0
        %v441 = vsel %vm439, %v436, 0.0
        %v442 = vadd.f32 %v440, %v441
        %443 = vadd.xlane.f32.xlu0 %v442
        %v444 = vpop.xlane.xlu0 %443
        %vm445 = vcmask 0
        %446 = vst.msk [vmem:[%s280] sm:$0x1] %vm445, %v444
        %v448 = vlaneseq
        %v449 = vshrl.u32 %v448, 7
        %v450 = vsub.s32 0, %v449
        %v451 = vrot.slane %v427, %v450
        %v452 = vlaneseq
        %v453 = vshrl.u32 %v452, 7
        %v454 = vsub.s32 1, %v453
        %v455 = vrot.slane %v427, %v454
        %v458 = vsel %vm439, %v451, 0.0
        %v459 = vsel %vm439, %v455, 0.0
        %v460 = vadd.f32 %v458, %v459
        %461 = vadd.xlane.f32.xlu0 %v460
        %v462 = vpop.xlane.xlu0 %461
        %463 = vst.msk [vmem:[%s286] sm:$0x1] %vm445, %v462
        %p464 = scmp.lt.s32.totalorder %s23, 1
        %s465 = scalar_select %p464, %s23, 1
        %p466 = scmp.lt.s32.totalorder %s24, 0
        %s467 = scalar_select %p466, %s24, 0
        %s468 = sadd.s32 %s467, %s465
        %s469 = scalar_lea.vmem %s3, %s468
        %p470 = scmp.lt.s32.totalorder %s23, 1
        %s471 = scalar_select %p470, %s23, 1
        %p472 = scmp.lt.s32.totalorder %s24, 0
        %s473 = scalar_select %p472, %s24, 0
        %s474 = sadd.s32 %s473, %s471
        %s475 = scalar_lea.vmem %s4, %s474
        // Predicated region
        $region37: #{tpu_custom_call.1} parent=31 // pred_check
          %p476 = pneg %p128
        $region38: #{tpu_custom_call.1} parent=31 // pred_check_branch
          %478 = sbr.rel (%p476) target = $region40
        $region39: #{tpu_custom_call.1} parent=31 // pred_region
          _
        $region40: #{tpu_custom_call.1} parent=31 // pred_fallthru
          _
        // Predicated region
        $region41: #{tpu_custom_call.1} parent=31 // pred_check
          %p479 = pneg %p156
        $region42: #{tpu_custom_call.1} parent=31 // pred_check_branch
          %481 = sbr.rel (%p479) target = $region44
        $region43: #{tpu_custom_call.1} parent=31 // pred_region
          _
        $region44: #{tpu_custom_call.1} parent=31 // pred_fallthru
          _
      $region32: #{tpu_custom_call.1} parent=5 // pred_fallthru
        _
      %p482 = scmp.le.s32.totalorder 2, %s14
      // Predicated region
      $region45: #{tpu_custom_call.1} parent=5 // pred_check
        %p483 = pneg %p482
      $region46: #{tpu_custom_call.1} parent=5 // pred_check_branch
        %485 = sbr.rel (%p483) target = $region48
      $region47: #{tpu_custom_call.1} parent=5 // pred_region
        %s486 = ssub.s32 %s14, 2
        // Predicated region
        $region49: #{tpu_custom_call.1} parent=47 // pred_check
          %p487 = pneg %p134
        $region50: #{tpu_custom_call.1} parent=47 // pred_check_branch
          %489 = sbr.rel (%p487) target = $region52
        $region51: #{tpu_custom_call.1} parent=47 // pred_region
          %p490 = scmp.lt.s32.totalorder %s25, 1
          %s491 = scalar_select %p490, %s25, 1
          %p492 = scmp.lt.s32.totalorder %s26, 0
          %s493 = scalar_select %p492, %s26, 0
          %s494 = sadd.s32 %s493, %s491
          %s495 = scalar_lea.vmem %s3, %s494
        $region52: #{tpu_custom_call.1} parent=47 // pred_fallthru
          _
        // Predicated region
        $region53: #{tpu_custom_call.1} parent=47 // pred_check
          %p496 = pneg %p162
        $region54: #{tpu_custom_call.1} parent=47 // pred_check_branch
          %498 = sbr.rel (%p496) target = $region56
        $region55: #{tpu_custom_call.1} parent=47 // pred_region
          %p499 = scmp.lt.s32.totalorder %s25, 1
          %s500 = scalar_select %p499, %s25, 1
          %p501 = scmp.lt.s32.totalorder %s26, 0
          %s502 = scalar_select %p501, %s26, 0
          %s503 = sadd.s32 %s502, %s500
          %s504 = scalar_lea.vmem %s4, %s503
        $region56: #{tpu_custom_call.1} parent=47 // pred_fallthru
          _
      $region48: #{tpu_custom_call.1} parent=5 // pred_fallthru
        _
    $region6: #{tpu_custom_call.1} parent=1 // loop_footer
      %s18 = sadd.s32 1, %s14
    $region7: #{tpu_custom_call.1} parent=1 // loop_footer_branch
      %13 = sbr.rel target = $region3
    $region8: #{tpu_custom_call.1} parent=1 // loop_exit
      _
    %505 = vsyncpa [#allocation3], 1
    %s506 = scalar_lea.sflag [#allocation3], 1
    %507 = vsyncpa %s506, 1

</llo_original>
